<compile_context>
chip_gen: v5e
topology: v5e:2x2
jax: 0.10.0
libtpu: 0.0.40
codegen_flags: <defaults>
</compile_context>

<pallas_src>
import functools

import numpy as np
import jax
import jax.numpy as jnp
from jax import lax
from jax.experimental import pallas as pl
from jax.experimental.pallas import tpu as pltpu

IRREPS_LS = (0, 1, 2)                       # degrees of the irreps (0e + 1o + 2e)
DIM = sum(2 * l + 1 for l in IRREPS_LS)     # 9
DIM2 = DIM * DIM                            # 81
MAX_M = max(IRREPS_LS)                      # 2
K_ROWS = 32                                 # 25 real basis rows, padded to 32 (sublane-aligned)
DEFAULT_BLOCK_N = 2048                      # batch tile (multiple of 128; ~5-6 MiB VMEM footprint)


# ----------------------------------------------------------------------------
# Host-side setup ("buffers"): real spherical harmonics, J matrix, z-rot masks,
# and the precomputed 25-term (theta x phi) basis table.
# ----------------------------------------------------------------------------
def _real_sh(l, pts):
    """Real spherical harmonics of degree l at unit points pts (K,3) -> (2l+1, K)."""
    x, y, z = pts[:, 0], pts[:, 1], pts[:, 2]
    if l == 0:
        return np.full((1, pts.shape[0]), 0.28209479177387814)
    if l == 1:
        c = 0.4886025119029199
        return np.stack([c * y, c * z, c * x])
    if l == 2:
        return np.stack([
            1.0925484305920792 * x * y,
            1.0925484305920792 * y * z,
            0.31539156525252005 * (3.0 * z * z - 1.0),
            1.0925484305920792 * x * z,
            0.5462742152960396 * (x * x - y * y),
        ])
    raise NotImplementedError(l)


def _compute_J():
    """Block-diagonal D(R_x(-pi/2)) in the real-SH basis, fit numerically (float64)."""
    C = np.array([[1., 0., 0.], [0., 0., 1.], [0., -1., 0.]])  # R_x(-pi/2): z -> y
    rng = np.random.default_rng(0)
    X = rng.normal(size=(256, 3))
    X /= np.linalg.norm(X, axis=1, keepdims=True)
    XC = X @ C.T
    J = np.zeros((DIM, DIM))
    off = 0
    for l in IRREPS_LS:
        B = _real_sh(l, X)         # (2l+1, K)
        A = _real_sh(l, XC)        # (2l+1, K)
        Dt, *_ = np.linalg.lstsq(B.T, A.T, rcond=None)   # solves D @ B = A
        J[off:off + 2 * l + 1, off:off + 2 * l + 1] = Dt.T
        off += 2 * l + 1
    J[np.abs(J) < 1e-12] = 0.0
    return J


def _build_masks():
    """Cmask/Smask: D(R_z(a)) = sum_m cos(m a) Cmask[m] + sin(m a) Smask[m]."""
    C = np.zeros((MAX_M + 1, DIM, DIM))
    S = np.zeros((MAX_M + 1, DIM, DIM))
    off = 0
    for l in IRREPS_LS:
        center = off + l
        C[0, center, center] = 1.0
        for m in range(1, l + 1):
            ip, im = center + m, center - m
            C[m, ip, ip] = 1.0
            C[m, im, im] = 1.0
            S[m, im, ip] = 1.0     # row (-m), col (+m): +sin(m a)
            S[m, ip, im] = -1.0    # row (+m), col (-m): -sin(m a)
        off += 2 * l + 1
    return C, S


def _build_k_table():
    """K[5*t1+t2] = flatten(J @ M'_{t1} @ J^T @ M'_{t2}), M' = [C0, C1, -S1, C2, -S2].

    With per-sample coefficients a = [1, cos t, sin t, cos 2t, sin 2t] (theta) and
    b = [1, cos p, sin p, cos 2p, sin 2p] (phi):
        D = sum_{t1,t2} a[t1] * b[t2] * K[5*t1+t2]   (the -sin signs are folded into K)
    which equals J @ Dz(-theta) @ J^T @ Dz(-phi).
    """
    J = _compute_J()
    C, S = _build_masks()
    terms = [C[0], C[1], -S[1], C[2], -S[2]]
    K = np.zeros((K_ROWS, DIM2), np.float64)
    k = 0
    for t1 in terms:
        left = J @ t1 @ J.T
        for t2 in terms:
            K[k] = (left @ t2).reshape(-1)
            k += 1
    return K.astype(np.float32)                      # rows 25..31 stay zero (padding)


_J_np = _compute_J()
_K_TABLE = jnp.asarray(_build_k_table())             # (32, 81) float32


# ----------------------------------------------------------------------------
# Pallas kernel: lane-major trig -> (BN, 32) coefficients -> one MXU matmul.
# ----------------------------------------------------------------------------
def _align_kernel(xyz_ref, k_ref, out_ref, *, normalized, eps):
    # xyz_ref: (3, BN) with the batch on lanes; out_ref: (BN, 81) lane-dense.
    x = xyz_ref[0:1, :]
    y = xyz_ref[1:2, :]
    z = xyz_ref[2:3, :]
    eps2 = eps * eps

    if normalized:
        # Angles are scale-invariant; normalization only affects the degenerate
        # (near-zero) handling, which the eps guards below reproduce.
        r2_in = x * x + y * y + z * z
        inv_n = lax.rsqrt(jnp.maximum(r2_in, eps2))
        x = x * inv_n
        y = y * inv_n
        z = z * inv_n

    xx = x * x
    yy = y * y
    rho2 = xx + yy
    r2 = rho2 + z * z
    inv_r = lax.rsqrt(jnp.maximum(r2, eps2))      # EUP
    inv_rho = lax.rsqrt(jnp.maximum(rho2, eps2))  # EUP
    r_ok = r2 > eps2
    rho_ok = rho2 > eps2

    cos_t = jnp.where(r_ok, z * inv_r, 1.0)                    # cos(theta)
    sin_t = jnp.where(r_ok, rho2 * inv_rho * inv_r, 0.0)       # sin(theta) = rho / r >= 0
    cos_p = jnp.where(rho_ok, x * inv_rho, 1.0)                # cos(phi)
    sin_p = jnp.where(rho_ok, y * inv_rho, 0.0)                # sin(phi)

    cos_2t = cos_t * cos_t - sin_t * sin_t
    sin_2t = 2.0 * sin_t * cos_t
    cos_2p = cos_p * cos_p - sin_p * sin_p
    sin_2p = 2.0 * sin_p * cos_p

    one = jnp.ones_like(cos_t)
    a_terms = (one, cos_t, sin_t, cos_2t, sin_2t)   # theta factors (signs folded into K)
    b_terms = (one, cos_p, sin_p, cos_2p, sin_2p)   # phi factors

    rows = [a_ * b_ for a_ in a_terms for b_ in b_terms]        # 25 x (1, BN), lane-major
    rows += [jnp.zeros_like(one)] * (K_ROWS - len(rows))        # pad to 32 rows
    coeffs = jnp.concatenate(rows, axis=0)                      # (32, BN)

    # One clean MXU matmul: (BN, 32) @ (32, 81) -> (BN, 81) lane-dense output.
    coeffs_t = coeffs.T                                         # (BN, 32), batch on sublanes
    d = jnp.dot(coeffs_t, k_ref[...], preferred_element_type=jnp.float32)
    out_ref[...] = d.astype(out_ref.dtype)


# ----------------------------------------------------------------------------
# Wrapper: flatten leading dims, pad batch, lane-major input, pallas_call.
# ----------------------------------------------------------------------------
def _round_up(a, b):
    return ((a + b - 1) // b) * b


def align_to_z_wigner_d(xyz, *, normalized=True, eps=1e-14, block_n=DEFAULT_BLOCK_N):
    xyz = jnp.asarray(xyz, jnp.float32)
    lead = xyz.shape[:-1]
    n = 1
    for s in lead:
        n *= int(s)
    flat = xyz.reshape(n, 3)

    bn = min(int(block_n), max(128, _round_up(n, 128)))
    bn = _round_up(bn, 128)                 # lane-aligned tile (also MXU-friendly row count)
    n_pad = _round_up(n, bn)
    if n_pad != n:
        flat = jnp.concatenate([flat, jnp.zeros((n_pad - n, 3), jnp.float32)], axis=0)
    xyz_t = flat.T                          # (3, n_pad): batch on lanes for the trig stage

    kernel = functools.partial(_align_kernel, normalized=bool(normalized), eps=float(eps))
    out = pl.pallas_call(
        kernel,
        out_shape=jax.ShapeDtypeStruct((n_pad, DIM2), jnp.float32),
        grid=(n_pad // bn,),
        in_specs=[
            pl.BlockSpec((3, bn), lambda i: (0, i)),            # xyz, lane-major
            pl.BlockSpec((K_ROWS, DIM2), lambda i: (0, 0)),     # constant basis table
        ],
        out_specs=pl.BlockSpec((bn, DIM2), lambda i: (i, 0)),   # lane-dense (BN, 81) slab
        compiler_params=pltpu.CompilerParams(dimension_semantics=("parallel",)),
    )(xyz_t, _K_TABLE)

    return out[:n].reshape(*lead, DIM, DIM)


# TODO(synk): equitorch's WignerRotationInfo carries COO-style sparse rotation indices;
# here the equivalent information is baked into the dense 25-term K basis (exact internal
# basis-order convention of equitorch may differ by a fixed permutation).

if __name__ == "__main__":
    key = jax.random.PRNGKey(0)
    xyz = jax.random.normal(key, (2, 4, 3), dtype=jnp.float32)

    d = jax.block_until_ready(align_to_z_wigner_d(xyz, normalized=True, eps=1e-14))
    assert d.shape == (2, 4, DIM, DIM), d.shape
    assert bool(jnp.all(jnp.isfinite(d)))

    # Sanity: D(R_align) @ Y(v_hat) == Y(z_hat)  (defining property of the alignment rotation)
    v = np.asarray(xyz, np.float64).reshape(-1, 3)
    vhat = v / np.linalg.norm(v, axis=1, keepdims=True)
    Yv = np.concatenate([_real_sh(l, vhat) for l in IRREPS_LS], axis=0)                     # (DIM, n)
    Yz = np.concatenate([_real_sh(l, np.array([[0., 0., 1.]])) for l in IRREPS_LS], axis=0)  # (DIM, 1)
    Dm = np.asarray(d, np.float64).reshape(-1, DIM, DIM)
    got = np.einsum('nij,jn->in', Dm, Yv)
    assert np.allclose(got, np.broadcast_to(Yz, got.shape), atol=1e-4), \
        float(np.abs(got - Yz).max())

    # Exercise the multi-tile grid path and check it matches the single-tile result.
    key2 = jax.random.PRNGKey(1)
    xyz_big = jax.random.normal(key2, (300, 3), dtype=jnp.float32)
    d_a = jax.block_until_ready(align_to_z_wigner_d(xyz_big, block_n=128))   # grid of 3 steps
    d_b = jax.block_until_ready(align_to_z_wigner_d(xyz_big))                # single tile
    assert d_a.shape == (300, DIM, DIM)
    assert np.allclose(np.asarray(d_a), np.asarray(d_b), atol=1e-5)

    print("KERNEL_OK")
</pallas_src>

<mosaic_0001>
module attributes {stable_mosaic.version = 11 : i64} {
  func.func @_align_kernel(%arg0: i32, %arg1: memref<3x128xf32, #tpu.memory_space<vmem>>, %arg2: memref<32x81xf32, #tpu.memory_space<vmem>>, %arg3: memref<128x81xf32, #tpu.memory_space<vmem>>) attributes {dimension_semantics = [#tpu.dimension_semantics<parallel>], iteration_bounds = array<i64: 1>, scalar_prefetch = 0 : i64, scratch_operands = 0 : i64, tpu.core_type = #tpu.core_type<tc>, window_params = [{transform_indices = @transform_0, window_bounds = array<i64: 3, 128>}, {pipeline_mode = #tpu.pipeline_mode<synchronous>, transform_indices = @transform_1, window_bounds = array<i64: 32, 81>}, {transform_indices = @transform_2, window_bounds = array<i64: 128, 81>}]} {
    %c0 = arith.constant 0 : index
    %c0_0 = arith.constant 0 : index
    %0 = vector.load %arg1[%c0, %c0_0] : memref<3x128xf32, #tpu.memory_space<vmem>>, vector<1x128xf32>
    %c1 = arith.constant 1 : index
    %c0_1 = arith.constant 0 : index
    %1 = vector.load %arg1[%c1, %c0_1] : memref<3x128xf32, #tpu.memory_space<vmem>>, vector<1x128xf32>
    %c2 = arith.constant 2 : index
    %c0_2 = arith.constant 0 : index
    %2 = vector.load %arg1[%c2, %c0_2] : memref<3x128xf32, #tpu.memory_space<vmem>>, vector<1x128xf32>
    %3 = arith.mulf %0, %0 : vector<1x128xf32>
    %4 = arith.mulf %1, %1 : vector<1x128xf32>
    %5 = arith.addf %3, %4 : vector<1x128xf32>
    %6 = arith.mulf %2, %2 : vector<1x128xf32>
    %7 = arith.addf %5, %6 : vector<1x128xf32>
    %cst = arith.constant 1.000000e-28 : f32
    %8 = vector.broadcast %cst : f32 to vector<1x128xf32>
    %9 = arith.maximumf %7, %8 : vector<1x128xf32>
    %10 = math.rsqrt %9 : vector<1x128xf32>
    %11 = arith.mulf %0, %10 : vector<1x128xf32>
    %12 = arith.mulf %1, %10 : vector<1x128xf32>
    %13 = arith.mulf %2, %10 : vector<1x128xf32>
    %14 = arith.mulf %11, %11 : vector<1x128xf32>
    %15 = arith.mulf %12, %12 : vector<1x128xf32>
    %16 = arith.addf %14, %15 : vector<1x128xf32>
    %17 = arith.mulf %13, %13 : vector<1x128xf32>
    %18 = arith.addf %16, %17 : vector<1x128xf32>
    %cst_3 = arith.constant 1.000000e-28 : f32
    %19 = vector.broadcast %cst_3 : f32 to vector<1x128xf32>
    %20 = arith.maximumf %18, %19 : vector<1x128xf32>
    %21 = math.rsqrt %20 : vector<1x128xf32>
    %cst_4 = arith.constant 1.000000e-28 : f32
    %22 = vector.broadcast %cst_4 : f32 to vector<1x128xf32>
    %23 = arith.maximumf %16, %22 : vector<1x128xf32>
    %24 = math.rsqrt %23 : vector<1x128xf32>
    %cst_5 = arith.constant 1.000000e-28 : f32
    %25 = vector.broadcast %cst_5 : f32 to vector<1x128xf32>
    %26 = arith.cmpf ogt, %18, %25 : vector<1x128xf32>
    %cst_6 = arith.constant 1.000000e-28 : f32
    %27 = vector.broadcast %cst_6 : f32 to vector<1x128xf32>
    %28 = arith.cmpf ogt, %16, %27 : vector<1x128xf32>
    %29 = arith.mulf %13, %21 : vector<1x128xf32>
    %cst_7 = arith.constant 1.000000e+00 : f32
    %30 = vector.broadcast %cst_7 : f32 to vector<1x128xf32>
    %31 = arith.select %26, %29, %30 : vector<1x128xi1>, vector<1x128xf32>
    %32 = arith.mulf %16, %24 : vector<1x128xf32>
    %33 = arith.mulf %32, %21 : vector<1x128xf32>
    %cst_8 = arith.constant 0.000000e+00 : f32
    %34 = vector.broadcast %cst_8 : f32 to vector<1x128xf32>
    %35 = arith.select %26, %33, %34 : vector<1x128xi1>, vector<1x128xf32>
    %36 = arith.mulf %11, %24 : vector<1x128xf32>
    %cst_9 = arith.constant 1.000000e+00 : f32
    %37 = vector.broadcast %cst_9 : f32 to vector<1x128xf32>
    %38 = arith.select %28, %36, %37 : vector<1x128xi1>, vector<1x128xf32>
    %39 = arith.mulf %12, %24 : vector<1x128xf32>
    %cst_10 = arith.constant 0.000000e+00 : f32
    %40 = vector.broadcast %cst_10 : f32 to vector<1x128xf32>
    %41 = arith.select %28, %39, %40 : vector<1x128xi1>, vector<1x128xf32>
    %42 = arith.mulf %31, %31 : vector<1x128xf32>
    %43 = arith.mulf %35, %35 : vector<1x128xf32>
    %44 = arith.subf %42, %43 : vector<1x128xf32>
    %cst_11 = arith.constant 2.000000e+00 : f32
    %45 = vector.broadcast %cst_11 : f32 to vector<1x128xf32>
    %46 = arith.mulf %45, %35 : vector<1x128xf32>
    %47 = arith.mulf %46, %31 : vector<1x128xf32>
    %48 = arith.mulf %38, %38 : vector<1x128xf32>
    %49 = arith.mulf %41, %41 : vector<1x128xf32>
    %50 = arith.subf %48, %49 : vector<1x128xf32>
    %cst_12 = arith.constant 2.000000e+00 : f32
    %51 = vector.broadcast %cst_12 : f32 to vector<1x128xf32>
    %52 = arith.mulf %51, %41 : vector<1x128xf32>
    %53 = arith.mulf %52, %38 : vector<1x128xf32>
    %cst_13 = arith.constant 1.000000e+00 : f32
    %54 = vector.broadcast %cst_13 : f32 to vector<1x128xf32>
    %55 = arith.mulf %54, %54 : vector<1x128xf32>
    %56 = arith.mulf %54, %38 : vector<1x128xf32>
    %57 = arith.mulf %54, %41 : vector<1x128xf32>
    %58 = arith.mulf %54, %50 : vector<1x128xf32>
    %59 = arith.mulf %54, %53 : vector<1x128xf32>
    %60 = arith.mulf %31, %54 : vector<1x128xf32>
    %61 = arith.mulf %31, %38 : vector<1x128xf32>
    %62 = arith.mulf %31, %41 : vector<1x128xf32>
    %63 = arith.mulf %31, %50 : vector<1x128xf32>
    %64 = arith.mulf %31, %53 : vector<1x128xf32>
    %65 = arith.mulf %35, %54 : vector<1x128xf32>
    %66 = arith.mulf %35, %38 : vector<1x128xf32>
    %67 = arith.mulf %35, %41 : vector<1x128xf32>
    %68 = arith.mulf %35, %50 : vector<1x128xf32>
    %69 = arith.mulf %35, %53 : vector<1x128xf32>
    %70 = arith.mulf %44, %54 : vector<1x128xf32>
    %71 = arith.mulf %44, %38 : vector<1x128xf32>
    %72 = arith.mulf %44, %41 : vector<1x128xf32>
    %73 = arith.mulf %44, %50 : vector<1x128xf32>
    %74 = arith.mulf %44, %53 : vector<1x128xf32>
    %75 = arith.mulf %47, %54 : vector<1x128xf32>
    %76 = arith.mulf %47, %38 : vector<1x128xf32>
    %77 = arith.mulf %47, %41 : vector<1x128xf32>
    %78 = arith.mulf %47, %50 : vector<1x128xf32>
    %79 = arith.mulf %47, %53 : vector<1x128xf32>
    %cst_14 = arith.constant 0.000000e+00 : f32
    %80 = vector.broadcast %cst_14 : f32 to vector<1x128xf32>
    %81 = tpu.concatenate %55, %56, %57, %58, %59, %60, %61, %62, %63, %64, %65, %66, %67, %68, %69, %70 in 0 : vector<1x128xf32>, vector<1x128xf32>, vector<1x128xf32>, vector<1x128xf32>, vector<1x128xf32>, vector<1x128xf32>, vector<1x128xf32>, vector<1x128xf32>, vector<1x128xf32>, vector<1x128xf32>, vector<1x128xf32>, vector<1x128xf32>, vector<1x128xf32>, vector<1x128xf32>, vector<1x128xf32>, vector<1x128xf32> -> vector<16x128xf32>
    %82 = tpu.concatenate %71, %72, %73, %74, %75, %76, %77, %78, %79, %80, %80, %80, %80, %80, %80, %80 in 0 : vector<1x128xf32>, vector<1x128xf32>, vector<1x128xf32>, vector<1x128xf32>, vector<1x128xf32>, vector<1x128xf32>, vector<1x128xf32>, vector<1x128xf32>, vector<1x128xf32>, vector<1x128xf32>, vector<1x128xf32>, vector<1x128xf32>, vector<1x128xf32>, vector<1x128xf32>, vector<1x128xf32>, vector<1x128xf32> -> vector<16x128xf32>
    %83 = tpu.concatenate %81, %82 in 0 : vector<16x128xf32>, vector<16x128xf32> -> vector<32x128xf32>
    %84 = tpu.transpose %83, [1, 0] : vector<32x128xf32> -> vector<128x32xf32>
    %c0_15 = arith.constant 0 : index
    %c0_16 = arith.constant 0 : index
    %85 = vector.load %arg2[%c0_15, %c0_16] : memref<32x81xf32, #tpu.memory_space<vmem>>, vector<32x81xf32>
    %cst_17 = arith.constant dense<0.000000e+00> : vector<128x81xf32>
    %86 = tpu.matmul %84, %85, %cst_17 {dimension_numbers = #tpu.dot_dimension_numbers<[1], [0], [0], [1], [0, 0, 1, 1], [], []>} : vector<128x32xf32>, vector<32x81xf32>, vector<128x81xf32> -> vector<128x81xf32>
    %c0_18 = arith.constant 0 : index
    %c0_19 = arith.constant 0 : index
    %87 = vector.load %arg3[%c0_18, %c0_19] : memref<128x81xf32, #tpu.memory_space<vmem>>, vector<128x81xf32>
    tpu.vector_store %arg3[%c0_18, %c0_19], %86 {strides = array<i32>} : memref<128x81xf32, #tpu.memory_space<vmem>>, vector<128x81xf32>,
    return
  }
  func.func @transform_0(%arg0: i32) -> (i32, i32) {
    %c0_i32 = arith.constant 0 : i32
    %c0_i32_0 = arith.constant 0 : i32
    return %c0_i32, %arg0 : i32, i32
  }
  func.func @transform_1(%arg0: i32) -> (i32, i32) {
    %c0_i32 = arith.constant 0 : i32
    %c0_i32_0 = arith.constant 0 : i32
    %c0_i32_1 = arith.constant 0 : i32
    return %c0_i32, %c0_i32_0 : i32, i32
  }
  func.func @transform_2(%arg0: i32) -> (i32, i32) {
    %c0_i32 = arith.constant 0 : i32
    %c0_i32_0 = arith.constant 0 : i32
    return %arg0, %c0_i32 : i32, i32
  }
}

</mosaic_0001>

<llo_original>
// kernel: tpu_custom_call.1
$region0: #{tpu_custom_call.1}
  #allocation0 [shape = 'u32[]', space=smem, size = 0x4, offset = 0x4, fixed_abs, tag = 'smem constant byte address 0x4 - core index']
  #allocation1 [shape = 'u32[72,128]{1,0:T(1,128)}', space=vmem, size = 0x9000, scoped, tag = 'internal scratch']
  %s0 = inlined_call_operand.hbm [shape: f32[3,128], index: 0, kind: input, shape index: {}]
  %s1 = inlined_call_operand.hbm [shape: f32[32,81], index: 1, kind: input, shape index: {}]
  %s2 = inlined_call_operand.vmem [shape: f32[128,81], index: 2, kind: output, shape index: {}]
  %s3 = sld [smem:[#allocation0]]
  $region26: #{tpu_custom_call.1} parent=0
    _
  %s5 = ssub.s32 1, %s3
  %s6 = scalar_select 0, %s5, %s3
  $region1: #{tpu_custom_call.1} parent=0
    #allocation2 [shape = 'u8[2048]{0}', space=vmem, size = 0x800, scoped, tag = 'input window, operand 0, single buffered']
    #allocation3 [shape = 's32[1]{0}', space=sflag, size = 0x4, scoped, tag = 'scoped memory for tpu_custom_call.1']
    #allocation4 [shape = 'u8[16384]{0}', space=vmem, size = 0x4000, scoped, tag = 'input window, operand 1, single buffered']
    #allocation5 [shape = 's32[1]{0}', space=sflag, size = 0x4, scoped, tag = 'scoped memory for tpu_custom_call.1']
    %7 = vsyncpa [#allocation3], 0
    %8 = vsyncpa [#allocation5], 0
    // Predicated region
    $region2: #{tpu_custom_call.1} parent=1 // pred_check
      _
    $region3: #{tpu_custom_call.1} parent=1 // pred_check_branch
      %10 = sbr.rel (0) target = $region5
    $region4: #{tpu_custom_call.1} parent=1 // pred_region
      %12 = vsyncadd [#allocation3], 0
      %s14 = sshll.u32 %s0, 4
      %s15 = int_to_ptr.hbm [resolvable:$true] %s14
      %s16 = sshll.u32 [#allocation2], 4
      %s17 = int_to_ptr.vmem [resolvable:$true] %s16
      %19 = dma.hbm_to_vmem [thread:$0]  %s15, 64, %s17, [#allocation3]
    $region5: #{tpu_custom_call.1} parent=1 // pred_fallthru
      _
    // Predicated region
    $region6: #{tpu_custom_call.1} parent=1 // pred_check
      _
    $region7: #{tpu_custom_call.1} parent=1 // pred_check_branch
      %21 = sbr.rel (0) target = $region9
    $region8: #{tpu_custom_call.1} parent=1 // pred_region
      %23 = vsyncadd [#allocation5], 0
      %s24 = sshll.u32 %s1, 4
      %s25 = int_to_ptr.hbm [resolvable:$true] %s24
      %s26 = sshll.u32 [#allocation4], 4
      %s27 = int_to_ptr.vmem [resolvable:$true] %s26
      %32 = dma.hbm_to_vmem [thread:$0]  %s25, 512, %s27, [#allocation5], 128, 128, 8
    $region9: #{tpu_custom_call.1} parent=1 // pred_fallthru
      _
    // Predicated region
    $region10: #{tpu_custom_call.1} parent=1 // pred_check
      _
    $region11: #{tpu_custom_call.1} parent=1 // pred_check_branch
      %34 = sbr.rel (0) target = $region13
    $region12: #{tpu_custom_call.1} parent=1 // pred_region
      %36 = dma.done [#allocation3], 64
    $region13: #{tpu_custom_call.1} parent=1 // pred_fallthru
      _
    // Predicated region
    $region14: #{tpu_custom_call.1} parent=1 // pred_check
      _
    $region15: #{tpu_custom_call.1} parent=1 // pred_check_branch
      %38 = sbr.rel (0) target = $region17
    $region16: #{tpu_custom_call.1} parent=1 // pred_region
      %40 = dma.done [#allocation5], 512
    $region17: #{tpu_custom_call.1} parent=1 // pred_fallthru
      _
    %v41 = vld [vmem:[#allocation2] sm:$0x1]
    %v42 = vld [vmem:[#allocation2 + $0x1] sm:$0x1]
    %v43 = vld [vmem:[#allocation2 + $0x2] sm:$0x1]
    %v44 = vmul.f32 %v41, %v41
    %v45 = vmul.f32 %v42, %v42
    %v46 = vadd.f32 %v44, %v45
    %v47 = vmul.f32 %v43, %v43
    %v48 = vadd.f32 %v46, %v47
    %v49 = vmax.f32 %v48, 1e-28
    %v50 = vrsqrt.pop %v49
    %v51 = vmul.f32 %v50, %v49
    %v52 = vmul.f32 %v51, %v50
    %v53 = vmul.f32 0.5, %v52
    %v54 = vsub.f32 1.5, %v53
    %v55 = vmul.f32 %v50, %v54
    %vm56 = vweird.f32 %v49
    %vm57 = vweird.f32 %v50
    %vm58 = vmor %vm56, %vm57
    %v59 = vsel %vm58, %v50, %v55
    %v60 = vmul.f32 %v41, %v59
    %v61 = vmul.f32 %v42, %v59
    %v62 = vmul.f32 %v43, %v59
    %v63 = vmul.f32 %v60, %v60
    %v64 = vmul.f32 %v61, %v61
    %v65 = vadd.f32 %v63, %v64
    %v66 = vmul.f32 %v62, %v62
    %v67 = vadd.f32 %v65, %v66
    %v68 = vmax.f32 %v67, 1e-28
    %v69 = vrsqrt.pop %v68
    %v70 = vmul.f32 %v69, %v68
    %v71 = vmul.f32 %v70, %v69
    %v72 = vmul.f32 0.5, %v71
    %v73 = vsub.f32 1.5, %v72
    %v74 = vmul.f32 %v69, %v73
    %vm75 = vweird.f32 %v68
    %vm76 = vweird.f32 %v69
    %vm77 = vmor %vm75, %vm76
    %v78 = vsel %vm77, %v69, %v74
    %v79 = vmax.f32 %v65, 1e-28
    %v80 = vrsqrt.pop %v79
    %v81 = vmul.f32 %v80, %v79
    %v82 = vmul.f32 %v81, %v80
    %v83 = vmul.f32 0.5, %v82
    %v84 = vsub.f32 1.5, %v83
    %v85 = vmul.f32 %v80, %v84
    %vm86 = vweird.f32 %v79
    %vm87 = vweird.f32 %v80
    %vm88 = vmor %vm86, %vm87
    %v89 = vsel %vm88, %v80, %v85
    %vm90 = vcmp.gt.f32.partialorder %v67, 1e-28
    %vm91 = vcmp.gt.f32.partialorder %v65, 1e-28
    %v92 = vmul.f32 %v62, %v78
    %v93 = vsel %vm90, %v92, 1.0
    %v94 = vmul.f32 %v65, %v89
    %v95 = vmul.f32 %v94, %v78
    %v96 = vsel %vm90, %v95, 0.0
    %v97 = vmul.f32 %v60, %v89
    %v98 = vsel %vm91, %v97, 1.0
    %v99 = vmul.f32 %v61, %v89
    %v100 = vsel %vm91, %v99, 0.0
    %v101 = vmul.f32 %v93, %v93
    %v102 = vmul.f32 %v96, %v96
    %v103 = vsub.f32 %v101, %v102
    %v104 = vmul.f32 %v96, 2.0
    %v105 = vmul.f32 %v104, %v93
    %v106 = vmul.f32 %v98, %v98
    %v107 = vmul.f32 %v100, %v100
    %v108 = vsub.f32 %v106, %v107
    %v109 = vmul.f32 %v100, 2.0
    %v110 = vmul.f32 %v109, %v98
    %v111 = vmul.f32 %v93, %v98
    %v112 = vmul.f32 %v93, %v100
    %v113 = vmul.f32 %v93, %v108
    %v114 = vmul.f32 %v93, %v110
    %v115 = vmul.f32 %v96, %v98
    %v116 = vmul.f32 %v96, %v100
    %v117 = vmul.f32 %v96, %v108
    %v118 = vmul.f32 %v96, %v110
    %v119 = vmul.f32 %v103, %v98
    %v120 = vmul.f32 %v103, %v100
    %v121 = vmul.f32 %v103, %v108
    %v122 = vmul.f32 %v103, %v110
    %v123 = vmul.f32 %v105, %v98
    %v124 = vmul.f32 %v105, %v100
    %v125 = vmul.f32 %v105, %v108
    %v126 = vmul.f32 %v105, %v110
    %v128 = vrot.slane %v98, 7
    %v131 = vrot.slane %v100, 6
    %v134 = vrot.slane %v108, 5
    %v137 = vrot.slane %v110, 4
    %v140 = vrot.slane %v93, 3
    %v143 = vrot.slane %v111, 2
    %v146 = vrot.slane %v112, 1
    %v149 = vrot.slane %v114, 7
    %v152 = vrot.slane %v96, 6
    %v155 = vrot.slane %v115, 5
    %v158 = vrot.slane %v116, 4
    %v161 = vrot.slane %v117, 3
    %v164 = vrot.slane %v118, 2
    %v167 = vrot.slane %v103, 1
    %vm169 = vcmask 1040384
    %v170 = vsel %vm169, 1.0, %v128
    %vm171 = vcmask 1041408
    %v172 = vsel %vm171, %v170, %v131
    %vm173 = vcmask 1042432
    %v174 = vsel %vm173, %v172, %v134
    %vm175 = vcmask 1043456
    %v176 = vsel %vm175, %v174, %v137
    %vm177 = vcmask 1044480
    %v178 = vsel %vm177, %v176, %v140
    %vm179 = vcmask 1045504
    %v180 = vsel %vm179, %v178, %v143
    %vm181 = vcmask 1046528
    %v182 = vsel %vm181, %v180, %v146
    %v183 = vsel %vm169, %v113, %v149
    %v184 = vsel %vm171, %v183, %v152
    %v185 = vsel %vm173, %v184, %v155
    %v186 = vsel %vm175, %v185, %v158
    %v187 = vsel %vm177, %v186, %v161
    %v188 = vsel %vm179, %v187, %v164
    %v189 = vsel %vm181, %v188, %v167
    %v191 = vrot.slane %v120, 7
    %v194 = vrot.slane %v121, 6
    %v197 = vrot.slane %v122, 5
    %v200 = vrot.slane %v105, 4
    %v203 = vrot.slane %v123, 3
    %v206 = vrot.slane %v124, 2
    %v209 = vrot.slane %v125, 1
    %v211 = vsel %vm169, %v119, %v191
    %v212 = vsel %vm171, %v211, %v194
    %v213 = vsel %vm173, %v212, %v197
    %v214 = vsel %vm175, %v213, %v200
    %v215 = vsel %vm177, %v214, %v203
    %v216 = vsel %vm179, %v215, %v206
    %v217 = vsel %vm181, %v216, %v209
    %v218 = vsel %vm169, %v126, 0.0
    %v219 = vsel %vm171, %v218, 0.0
    %v220 = vsel %vm173, %v219, 0.0
    %v221 = vsel %vm175, %v220, 0.0
    %v222 = vsel %vm177, %v221, 0.0
    %v223 = vsel %vm179, %v222, 0.0
    %v224 = vsel %vm181, %v223, 0.0
    %225 = vxpose.xlu0.b32.start [1/16] %v182, 128
    %226 = vxpose.xlu0.b32.cont [2/16] %v189, 128
    %227 = vxpose.xlu0.b32.cont [3/16] %v217, 128
    %228 = vxpose.xlu0.b32.cont [4/16] %v224, 128
    %229 = vxpose.xlu0.b32.cont [5/16] 0.0, 128
    %230 = vxpose.xlu0.b32.cont [6/16] 0.0, 128
    %231 = vxpose.xlu0.b32.cont [7/16] 0.0, 128
    %232 = vxpose.xlu0.b32.cont [8/16] 0.0, 128
    %233 = vxpose.xlu0.b32.cont [9/16] 0.0, 128
    %234 = vxpose.xlu0.b32.cont [10/16] 0.0, 128
    %235 = vxpose.xlu0.b32.cont [11/16] 0.0, 128
    %236 = vxpose.xlu0.b32.cont [12/16] 0.0, 128
    %237 = vxpose.xlu0.b32.cont [13/16] 0.0, 128
    %238 = vxpose.xlu0.b32.cont [14/16] 0.0, 128
    %239 = vxpose.xlu0.b32.cont [15/16] 0.0, 128
    %240 = vxpose.xlu0.b32.end [16/16] 0.0, 128
    %v241 = vpop.trf.xlu0
    %v242 = vpop.trf.xlu0
    %v243 = vpop.trf.xlu0
    %v244 = vpop.trf.xlu0
    %v245 = vpop.trf.xlu0
    %v246 = vpop.trf.xlu0
    %v247 = vpop.trf.xlu0
    %v248 = vpop.trf.xlu0
    %v249 = vpop.trf.xlu0
    %v250 = vpop.trf.xlu0
    %v251 = vpop.trf.xlu0
    %v252 = vpop.trf.xlu0
    %v253 = vpop.trf.xlu0
    %v254 = vpop.trf.xlu0
    %v255 = vpop.trf.xlu0
    %v256 = vpop.trf.xlu0
    %v257 = vld [vmem:[#allocation4] sm:$0xff]
    %v258 = vld [vmem:[#allocation4 + $0x8] sm:$0xff]
    %v259 = vld [vmem:[#allocation4 + $0x10] sm:$0xff]
    %v260 = vld [vmem:[#allocation4 + $0x18] sm:$0xff]
    %vm261 = vcmask 261120
    %v263 = vsel %vm261, %v241, 0
    %v266 = vsel %vm261, %v242, 0
    %v269 = vsel %vm261, %v243, 0
    %v272 = vsel %vm261, %v244, 0
    %v275 = vsel %vm261, %v245, 0
    %v278 = vsel %vm261, %v246, 0
    %v281 = vsel %vm261, %v247, 0
    %v284 = vsel %vm261, %v248, 0
    %v287 = vsel %vm261, %v249, 0
    %v290 = vsel %vm261, %v250, 0
    %v293 = vsel %vm261, %v251, 0
    %v296 = vsel %vm261, %v252, 0
    %v299 = vsel %vm261, %v253, 0
    %v302 = vsel %vm261, %v254, 0
    %v305 = vsel %vm261, %v255, 0
    %v308 = vsel %vm261, %v256, 0
    %310 = vmatpush.msra.mxu0 0.0
    %311 = vmatpush.msra.mxu0 0.0
    %312 = vmatpush.msra.mxu0 0.0
    %313 = vmatpush.msra.mxu0 0.0
    %314 = vmatpush.msra.mxu0 0.0
    %315 = vmatpush.msra.mxu0 0.0
    %316 = vmatpush.msra.mxu0 0.0
    %317 = vmatpush.msra.mxu0 0.0
    %318 = vmatpush.msra.mxu0 0.0
    %319 = vmatpush.msra.mxu0 0.0
    %320 = vmatpush.msra.mxu0 0.0
    %321 = vmatpush.msra.mxu0 0.0
    %322 = vmatpush.msra.mxu0 %v260
    %323 = vmatpush.msra.mxu0 %v259
    %324 = vmatpush.msra.mxu0 %v258
    %325 = vmatpush.msra.mxu0 %v257
    %326 = vmatmul.f32.gmra.mxu0 %v263
    %v327 = vpop.f32.mrf.mxu0
    %v328 = vadd.f32 0.0, %v327
    %329 = vmatmul.f32.gmra.mxu0 %v266
    %v330 = vpop.f32.mrf.mxu0
    %v331 = vadd.f32 0.0, %v330
    %332 = vmatmul.f32.gmra.mxu0 %v269
    %v333 = vpop.f32.mrf.mxu0
    %v334 = vadd.f32 0.0, %v333
    %335 = vmatmul.f32.gmra.mxu0 %v272
    %v336 = vpop.f32.mrf.mxu0
    %v337 = vadd.f32 0.0, %v336
    %338 = vmatmul.f32.gmra.mxu0 %v275
    %v339 = vpop.f32.mrf.mxu0
    %v340 = vadd.f32 0.0, %v339
    %341 = vmatmul.f32.gmra.mxu0 %v278
    %v342 = vpop.f32.mrf.mxu0
    %v343 = vadd.f32 0.0, %v342
    %344 = vmatmul.f32.gmra.mxu0 %v281
    %v345 = vpop.f32.mrf.mxu0
    %v346 = vadd.f32 0.0, %v345
    %347 = vmatmul.f32.gmra.mxu0 %v284
    %v348 = vpop.f32.mrf.mxu0
    %v349 = vadd.f32 0.0, %v348
    %350 = vmatmul.f32.gmra.mxu0 %v287
    %v351 = vpop.f32.mrf.mxu0
    %v352 = vadd.f32 0.0, %v351
    %353 = vmatmul.f32.gmra.mxu0 %v290
    %v354 = vpop.f32.mrf.mxu0
    %v355 = vadd.f32 0.0, %v354
    %356 = vmatmul.f32.gmra.mxu0 %v293
    %v357 = vpop.f32.mrf.mxu0
    %v358 = vadd.f32 0.0, %v357
    %359 = vmatmul.f32.gmra.mxu0 %v296
    %v360 = vpop.f32.mrf.mxu0
    %v361 = vadd.f32 0.0, %v360
    %362 = vmatmul.f32.gmra.mxu0 %v299
    %v363 = vpop.f32.mrf.mxu0
    %v364 = vadd.f32 0.0, %v363
    %365 = vmatmul.f32.gmra.mxu0 %v302
    %v366 = vpop.f32.mrf.mxu0
    %v367 = vadd.f32 0.0, %v366
    %368 = vmatmul.f32.gmra.mxu0 %v305
    %v369 = vpop.f32.mrf.mxu0
    %v370 = vadd.f32 0.0, %v369
    %371 = vmatmul.f32.gmra.mxu0 %v308
    %v372 = vpop.f32.mrf.mxu0
    %v373 = vadd.f32 0.0, %v372
    %374 = vdwg.mxu0
    %vm375 = vcmask 662528
    %376 = vst.msk [vmem:[%s2] sm:$0xff] %vm375, %v328
    %377 = vst.msk [vmem:[%s2 + $0x8] sm:$0xff] %vm375, %v331
    %378 = vst.msk [vmem:[%s2 + $0x10] sm:$0xff] %vm375, %v334
    %379 = vst.msk [vmem:[%s2 + $0x18] sm:$0xff] %vm375, %v337
    %380 = vst.msk [vmem:[%s2 + $0x20] sm:$0xff] %vm375, %v340
    %381 = vst.msk [vmem:[%s2 + $0x28] sm:$0xff] %vm375, %v343
    %382 = vst.msk [vmem:[%s2 + $0x30] sm:$0xff] %vm375, %v346
    %383 = vst.msk [vmem:[%s2 + $0x38] sm:$0xff] %vm375, %v349
    %384 = vst.msk [vmem:[%s2 + $0x40] sm:$0xff] %vm375, %v352
    %385 = vst.msk [vmem:[%s2 + $0x48] sm:$0xff] %vm375, %v355
    %386 = vst.msk [vmem:[%s2 + $0x50] sm:$0xff] %vm375, %v358
    %387 = vst.msk [vmem:[%s2 + $0x58] sm:$0xff] %vm375, %v361
    %388 = vst.msk [vmem:[%s2 + $0x60] sm:$0xff] %vm375, %v364
    %389 = vst.msk [vmem:[%s2 + $0x68] sm:$0xff] %vm375, %v367
    %390 = vst.msk [vmem:[%s2 + $0x70] sm:$0xff] %vm375, %v370
    %391 = vst.msk [vmem:[%s2 + $0x78] sm:$0xff] %vm375, %v373
    // Predicated region
    $region18: #{tpu_custom_call.1} parent=1 // pred_check
      _
    $region19: #{tpu_custom_call.1} parent=1 // pred_check_branch
      %393 = sbr.rel (0) target = $region21
    $region20: #{tpu_custom_call.1} parent=1 // pred_region
      _
    $region21: #{tpu_custom_call.1} parent=1 // pred_fallthru
      _
    // Predicated region
    $region22: #{tpu_custom_call.1} parent=1 // pred_check
      _
    $region23: #{tpu_custom_call.1} parent=1 // pred_check_branch
      %395 = sbr.rel (0) target = $region25
    $region24: #{tpu_custom_call.1} parent=1 // pred_region
      _
    $region25: #{tpu_custom_call.1} parent=1 // pred_fallthru
      _
    %396 = vsyncpa [#allocation3], 1
    %397 = vsyncpa [#allocation5], 1

</llo_original>
